<compile_context>
chip_gen: v7x
topology: tpu7x:2x2x1
jax: 0.10.0
libtpu: 0.0.40
codegen_flags: <defaults>
</compile_context>

<pallas_src>
import functools

import jax
import jax.numpy as jnp
from jax.experimental import pallas as pl
from jax.experimental.pallas import tpu as pltpu

C_IN, C_OUT, KH, KW = 16, 120, 5, 5
C_OUT_PAD = 128                 # lane-dense output width (multiple of 128)
K_DIM = KH * KW * C_IN          # 400 = im2col contraction size
K_PAD = 512                     # contraction padded to a multiple of 128
_M_ALIGN = 16                   # bf16 sublane-pack alignment for the M tiles


def _round_up(x, m):
    return (x + m - 1) // m * m


def _choose_m_tiling(m, block_m):
    """Pick (tm, m_pad) for the GEMM M dimension.

    Small inputs collapse to a single grid step; larger inputs are split into
    an even number of ~block_m tiles so v7x's two TensorCores share the
    "parallel" grid axis.
    """
    m_aln = _round_up(max(m, _M_ALIGN), _M_ALIGN)
    if m_aln <= block_m:
        return m_aln, m_aln
    n_tiles = _round_up(pl.cdiv(m_aln, block_m), 2)     # even grid for v7x
    tm = _round_up(pl.cdiv(m_aln, n_tiles), _M_ALIGN)
    m_pad = _round_up(m_aln, tm)
    return tm, m_pad


def _c5_gemm_kernel(x_ref, w_ref, b_ref, o_ref):
    # x_ref: (TM, 512) bf16 | w_ref: (512, 128) bf16 | b_ref: (1, 128) f32
    # o_ref: (TM, 128) f32
    acc = jnp.dot(x_ref[...], w_ref[...], preferred_element_type=jnp.float32)
    acc = acc + b_ref[...]                       # bias broadcast over rows, f32
    o_ref[...] = jnp.maximum(acc, 0.0).astype(o_ref.dtype)


def prepare_c5_params(weight, bias):
    """One-time parameter transform (call at init, NOT per forward).

    weight: (120, 16, 5, 5) PyTorch OIHW -> (512, 128) bf16 GEMM weight with
    rows ordered (ky, kx, c_in) to match the im2col patch ordering, zero-padded
    400->512 rows and 120->128 columns. bias -> (1, 128) f32.
    """
    w = jnp.transpose(weight, (2, 3, 1, 0)).reshape(K_DIM, C_OUT)   # (400,120)
    w = jnp.pad(w, ((0, K_PAD - K_DIM), (0, C_OUT_PAD - C_OUT)))    # (512,128)
    w_gemm = w.astype(jnp.bfloat16)
    b_pad = jnp.pad(bias, (0, C_OUT_PAD - C_OUT)).reshape(1, C_OUT_PAD)
    return w_gemm, b_pad.astype(jnp.float32)


@functools.partial(jax.jit, static_argnames=("block_m",))
def c5_forward(x, w_gemm, b_pad, *, block_m=1024):
    """x: (B, 16, H, W) f32 NCHW. Returns relu(conv2d(x, W) + b): (B, 120, OH, OW)."""
    B, _, H, W = x.shape
    OH, OW = H - KH + 1, W - KW + 1
    M = B * OH * OW

    # --- im2col (pure JAX layout plumbing, fused by XLA around pallas_call) --
    # Cast to bf16 FIRST so the transpose and the materialized patch buffer
    # move half the bytes. Patch feature ordering is (ky, kx, c_in).
    x_nhwc = jnp.transpose(x.astype(jnp.bfloat16), (0, 2, 3, 1))    # (B,H,W,16)
    patches = [x_nhwc[:, ky:ky + OH, kx:kx + OW, :]
               for ky in range(KH) for kx in range(KW)]
    x_gemm = jnp.concatenate(patches, axis=-1).reshape(M, K_DIM)    # (M, 400)

    # Pad M (rows) to a multiple of the tile and K (cols) 400 -> 512.
    tm, m_pad = _choose_m_tiling(M, block_m)
    x_gemm = jnp.pad(x_gemm, ((0, m_pad - M), (0, K_PAD - K_DIM)))  # (m_pad,512)

    cost = pl.CostEstimate(
        flops=2 * m_pad * K_PAD * C_OUT_PAD,
        transcendentals=0,
        bytes_accessed=(2 * m_pad * K_PAD            # bf16 x tiles
                        + 2 * K_PAD * C_OUT_PAD      # bf16 weight
                        + 4 * C_OUT_PAD              # f32 bias
                        + 4 * m_pad * C_OUT_PAD),    # f32 output
    )

    out = pl.pallas_call(
        _c5_gemm_kernel,
        out_shape=jax.ShapeDtypeStruct((m_pad, C_OUT_PAD), jnp.float32),
        grid=(m_pad // tm,),
        in_specs=[
            pl.BlockSpec((tm, K_PAD), lambda i: (i, 0)),          # x tiles (pipelined)
            pl.BlockSpec((K_PAD, C_OUT_PAD), lambda i: (0, 0)),   # weight resident
            pl.BlockSpec((1, C_OUT_PAD), lambda i: (0, 0)),       # bias resident
        ],
        out_specs=pl.BlockSpec((tm, C_OUT_PAD), lambda i: (i, 0)),
        compiler_params=pltpu.CompilerParams(
            dimension_semantics=("parallel",)),
        cost_estimate=cost,
    )(x_gemm, w_gemm, b_pad)

    # Drop M / channel padding, restore NCHW (module contract). A surrounding
    # network that keeps NHWC activations (and tolerates the 128-padded
    # channel dim) can skip this slice/reshape/transpose entirely.
    out = out[:M, :C_OUT].reshape(B, OH, OW, C_OUT)
    return jnp.transpose(out, (0, 3, 1, 2))


if __name__ == "__main__":
    key = jax.random.PRNGKey(0)
    k_x, k_w, k_b = jax.random.split(key, 3)

    B, H, W = 4, 12, 12                 # small shapes; OH = OW = 8

    # Deterministic init matching nn.Conv2d's uniform fan-in bound.
    fan_in = C_IN * KH * KW
    bound = 1.0 / jnp.sqrt(fan_in)
    weight = jax.random.uniform(k_w, (C_OUT, C_IN, KH, KW), jnp.float32,
                                -bound, bound)
    bias = jax.random.uniform(k_b, (C_OUT,), jnp.float32, -bound, bound)
    x = jax.random.normal(k_x, (B, C_IN, H, W), jnp.float32)

    w_gemm, b_pad = prepare_c5_params(weight, bias)   # hoisted param prep
    out = jax.block_until_ready(c5_forward(x, w_gemm, b_pad))

    OH, OW = H - KH + 1, W - KW + 1
    assert out.shape == (B, C_OUT, OH, OW)

    # Tight check: reference with the SAME operand rounding as the kernel
    # (bf16-rounded x and W, f32 accumulate), so it verifies the kernel math.
    xq = x.astype(jnp.bfloat16).astype(jnp.float32)
    wq = weight.astype(jnp.bfloat16).astype(jnp.float32)
    ref_bf16 = jax.lax.conv_general_dilated(
        xq, wq, window_strides=(1, 1), padding="VALID",
        dimension_numbers=("NCHW", "OIHW", "NCHW"),
        precision=jax.lax.Precision.HIGHEST)
    ref_bf16 = jnp.maximum(ref_bf16 + bias.reshape(1, C_OUT, 1, 1), 0.0)
    assert jnp.allclose(out, ref_bf16, atol=1e-3, rtol=1e-3)

    # Loose end-to-end sanity check against the full-f32 reference
    # (bf16 operand rounding makes ~1e-4 rel precision unattainable).
    ref_f32 = jax.lax.conv_general_dilated(
        x, weight, window_strides=(1, 1), padding="VALID",
        dimension_numbers=("NCHW", "OIHW", "NCHW"),
        precision=jax.lax.Precision.HIGHEST)
    ref_f32 = jnp.maximum(ref_f32 + bias.reshape(1, C_OUT, 1, 1), 0.0)
    assert jnp.allclose(out, ref_f32, atol=5e-2, rtol=5e-2)

    print("KERNEL_OK")
</pallas_src>

<mosaic_0001>
module attributes {stable_mosaic.version = 11 : i64} {
  func.func @_c5_gemm_kernel(%arg0: i32, %arg1: memref<256x512xbf16, #tpu.memory_space<vmem>>, %arg2: memref<512x128xbf16, #tpu.memory_space<vmem>>, %arg3: memref<1x128xf32, #tpu.memory_space<vmem>>, %arg4: memref<256x128xf32, #tpu.memory_space<vmem>>) attributes {dimension_semantics = [#tpu.dimension_semantics<parallel>], iteration_bounds = array<i64: 1>, scalar_prefetch = 0 : i64, scratch_operands = 0 : i64, tpu.core_type = #tpu.core_type<tc>, window_params = [{transform_indices = @transform_0, window_bounds = array<i64: 256, 512>}, {pipeline_mode = #tpu.pipeline_mode<synchronous>, transform_indices = @transform_1, window_bounds = array<i64: 512, 128>}, {pipeline_mode = #tpu.pipeline_mode<synchronous>, transform_indices = @transform_2, window_bounds = array<i64: 1, 128>}, {transform_indices = @transform_3, window_bounds = array<i64: 256, 128>}]} {
    %c0 = arith.constant 0 : index
    %c0_0 = arith.constant 0 : index
    %0 = vector.load %arg1[%c0, %c0_0] : memref<256x512xbf16, #tpu.memory_space<vmem>>, vector<256x512xbf16>
    %c0_1 = arith.constant 0 : index
    %c0_2 = arith.constant 0 : index
    %1 = vector.load %arg2[%c0_1, %c0_2] : memref<512x128xbf16, #tpu.memory_space<vmem>>, vector<512x128xbf16>
    %cst = arith.constant dense<0.000000e+00> : vector<256x128xf32>
    %2 = tpu.matmul %0, %1, %cst {dimension_numbers = #tpu.dot_dimension_numbers<[1], [0], [0], [1], [0, 0, 1, 1], [], []>} : vector<256x512xbf16>, vector<512x128xbf16>, vector<256x128xf32> -> vector<256x128xf32>
    %c0_3 = arith.constant 0 : index
    %c0_4 = arith.constant 0 : index
    %3 = vector.load %arg3[%c0_3, %c0_4] : memref<1x128xf32, #tpu.memory_space<vmem>>, vector<1x128xf32>
    %4 = vector.broadcast %3 : vector<1x128xf32> to vector<256x128xf32>
    %5 = arith.addf %2, %4 : vector<256x128xf32>
    %cst_5 = arith.constant 0.000000e+00 : f32
    %6 = vector.broadcast %cst_5 : f32 to vector<256x128xf32>
    %7 = arith.maximumf %5, %6 : vector<256x128xf32>
    %c0_6 = arith.constant 0 : index
    %c0_7 = arith.constant 0 : index
    %8 = vector.load %arg4[%c0_6, %c0_7] : memref<256x128xf32, #tpu.memory_space<vmem>>, vector<256x128xf32>
    tpu.vector_store %arg4[%c0_6, %c0_7], %7 {strides = array<i32>} : memref<256x128xf32, #tpu.memory_space<vmem>>, vector<256x128xf32>,
    return
  }
  func.func @transform_0(%arg0: i32) -> (i32, i32) {
    %c0_i32 = arith.constant 0 : i32
    %c0_i32_0 = arith.constant 0 : i32
    return %arg0, %c0_i32 : i32, i32
  }
  func.func @transform_1(%arg0: i32) -> (i32, i32) {
    %c0_i32 = arith.constant 0 : i32
    %c0_i32_0 = arith.constant 0 : i32
    %c0_i32_1 = arith.constant 0 : i32
    return %c0_i32, %c0_i32_0 : i32, i32
  }
  func.func @transform_2(%arg0: i32) -> (i32, i32) {
    %c0_i32 = arith.constant 0 : i32
    %c0_i32_0 = arith.constant 0 : i32
    %c0_i32_1 = arith.constant 0 : i32
    return %c0_i32, %c0_i32_0 : i32, i32
  }
  func.func @transform_3(%arg0: i32) -> (i32, i32) {
    %c0_i32 = arith.constant 0 : i32
    %c0_i32_0 = arith.constant 0 : i32
    return %arg0, %c0_i32 : i32, i32
  }
}

</mosaic_0001>

<llo_original>
// kernel: c5_forward.1
$region0: #{c5_forward.1}
  #allocation0 [shape = 'u32[]', space=smem, size = 0x4, offset = 0x4, fixed_abs, tag = 'smem constant byte address 0x4 - core index']
  #allocation1 [shape = 'u32[144,128]{1,0:T(1,128)}', space=vmem, size = 0x12000, scoped, tag = 'internal scratch']
  %s0 = inlined_call_operand.vmem [shape: bf16[256,512], index: 0, kind: input, shape index: {}]
  %s1 = inlined_call_operand.vmem [shape: bf16[512,128], index: 1, kind: input, shape index: {}]
  %s2 = inlined_call_operand.vmem [shape: f32[1,128], index: 2, kind: input, shape index: {}]
  %s3 = inlined_call_operand.hbm [shape: f32[256,128], index: 3, kind: output, shape index: {}]
  %s4 = sld [smem:[#allocation0]]
  $region22: #{c5_forward.1} parent=0
    _
  %s6 = ssub.s32 1, %s4
  %s7 = scalar_select 0, %s6, %s4
  $region1: #{c5_forward.1} parent=0
    #allocation2 [shape = 'u8[131072]{0}', space=vmem, size = 0x20000, scoped, tag = 'output window, operand 0, single buffered']
    #allocation3 [shape = 's32[1]{0}', space=sflag, size = 0x4, scoped, tag = 'scoped memory for c5_forward.1']
    %8 = vsyncpa [#allocation3], 0
    // Predicated region
    $region2: #{c5_forward.1} parent=1 // pred_check
      _
    $region3: #{c5_forward.1} parent=1 // pred_check_branch
      %10 = sbr.rel (0) target = $region5
    $region4: #{c5_forward.1} parent=1 // pred_region
      _
    $region5: #{c5_forward.1} parent=1 // pred_fallthru
      _
    // Predicated region
    $region6: #{c5_forward.1} parent=1 // pred_check
      _
    $region7: #{c5_forward.1} parent=1 // pred_check_branch
      %12 = sbr.rel (0) target = $region9
    $region8: #{c5_forward.1} parent=1 // pred_region
      _
    $region9: #{c5_forward.1} parent=1 // pred_fallthru
      _
    // Predicated region
    $region10: #{c5_forward.1} parent=1 // pred_check
      _
    $region11: #{c5_forward.1} parent=1 // pred_check_branch
      %14 = sbr.rel (0) target = $region13
    $region12: #{c5_forward.1} parent=1 // pred_region
      _
    $region13: #{c5_forward.1} parent=1 // pred_fallthru
      _
    %v16 = vld [vmem:[%s0] sm:$0xff]
    %v17 = vld [vmem:[%s0 + $0x8] sm:$0xff]
    %v18 = vld [vmem:[%s0 + $0x10] sm:$0xff]
    %v19 = vld [vmem:[%s0 + $0x18] sm:$0xff]
    %v20 = vld [vmem:[%s0 + $0x20] sm:$0xff]
    %v21 = vld [vmem:[%s0 + $0x28] sm:$0xff]
    %v22 = vld [vmem:[%s0 + $0x30] sm:$0xff]
    %v23 = vld [vmem:[%s0 + $0x38] sm:$0xff]
    %v24 = vld [vmem:[%s0 + $0x40] sm:$0xff]
    %v25 = vld [vmem:[%s0 + $0x48] sm:$0xff]
    %v26 = vld [vmem:[%s0 + $0x50] sm:$0xff]
    %v27 = vld [vmem:[%s0 + $0x58] sm:$0xff]
    %v28 = vld [vmem:[%s0 + $0x60] sm:$0xff]
    %v29 = vld [vmem:[%s0 + $0x68] sm:$0xff]
    %v30 = vld [vmem:[%s0 + $0x70] sm:$0xff]
    %v31 = vld [vmem:[%s0 + $0x78] sm:$0xff]
    %v32 = vld [vmem:[%s0 + $0x80] sm:$0xff]
    %v33 = vld [vmem:[%s0 + $0x88] sm:$0xff]
    %v34 = vld [vmem:[%s0 + $0x90] sm:$0xff]
    %v35 = vld [vmem:[%s0 + $0x98] sm:$0xff]
    %v36 = vld [vmem:[%s0 + $0xa0] sm:$0xff]
    %v37 = vld [vmem:[%s0 + $0xa8] sm:$0xff]
    %v38 = vld [vmem:[%s0 + $0xb0] sm:$0xff]
    %v39 = vld [vmem:[%s0 + $0xb8] sm:$0xff]
    %v40 = vld [vmem:[%s0 + $0xc0] sm:$0xff]
    %v41 = vld [vmem:[%s0 + $0xc8] sm:$0xff]
    %v42 = vld [vmem:[%s0 + $0xd0] sm:$0xff]
    %v43 = vld [vmem:[%s0 + $0xd8] sm:$0xff]
    %v44 = vld [vmem:[%s0 + $0xe0] sm:$0xff]
    %v45 = vld [vmem:[%s0 + $0xe8] sm:$0xff]
    %v46 = vld [vmem:[%s0 + $0xf0] sm:$0xff]
    %v47 = vld [vmem:[%s0 + $0xf8] sm:$0xff]
    %v48 = vld [vmem:[%s0 + $0x100] sm:$0xff]
    %v49 = vld [vmem:[%s0 + $0x108] sm:$0xff]
    %v50 = vld [vmem:[%s0 + $0x110] sm:$0xff]
    %v51 = vld [vmem:[%s0 + $0x118] sm:$0xff]
    %v52 = vld [vmem:[%s0 + $0x120] sm:$0xff]
    %v53 = vld [vmem:[%s0 + $0x128] sm:$0xff]
    %v54 = vld [vmem:[%s0 + $0x130] sm:$0xff]
    %v55 = vld [vmem:[%s0 + $0x138] sm:$0xff]
    %v56 = vld [vmem:[%s0 + $0x140] sm:$0xff]
    %v57 = vld [vmem:[%s0 + $0x148] sm:$0xff]
    %v58 = vld [vmem:[%s0 + $0x150] sm:$0xff]
    %v59 = vld [vmem:[%s0 + $0x158] sm:$0xff]
    %v60 = vld [vmem:[%s0 + $0x160] sm:$0xff]
    %v61 = vld [vmem:[%s0 + $0x168] sm:$0xff]
    %v62 = vld [vmem:[%s0 + $0x170] sm:$0xff]
    %v63 = vld [vmem:[%s0 + $0x178] sm:$0xff]
    %v64 = vld [vmem:[%s0 + $0x180] sm:$0xff]
    %v65 = vld [vmem:[%s0 + $0x188] sm:$0xff]
    %v66 = vld [vmem:[%s0 + $0x190] sm:$0xff]
    %v67 = vld [vmem:[%s0 + $0x198] sm:$0xff]
    %v68 = vld [vmem:[%s0 + $0x1a0] sm:$0xff]
    %v69 = vld [vmem:[%s0 + $0x1a8] sm:$0xff]
    %v70 = vld [vmem:[%s0 + $0x1b0] sm:$0xff]
    %v71 = vld [vmem:[%s0 + $0x1b8] sm:$0xff]
    %v72 = vld [vmem:[%s0 + $0x1c0] sm:$0xff]
    %v73 = vld [vmem:[%s0 + $0x1c8] sm:$0xff]
    %v74 = vld [vmem:[%s0 + $0x1d0] sm:$0xff]
    %v75 = vld [vmem:[%s0 + $0x1d8] sm:$0xff]
    %v76 = vld [vmem:[%s0 + $0x1e0] sm:$0xff]
    %v77 = vld [vmem:[%s0 + $0x1e8] sm:$0xff]
    %v78 = vld [vmem:[%s0 + $0x1f0] sm:$0xff]
    %v79 = vld [vmem:[%s0 + $0x1f8] sm:$0xff]
    %v80 = vld [vmem:[%s1] sm:$0xf]
    %v81 = vld [vmem:[%s1 + $0x4] sm:$0xf]
    %v82 = vld [vmem:[%s1 + $0x8] sm:$0xf]
    %v83 = vld [vmem:[%s1 + $0xc] sm:$0xf]
    %v84 = vld [vmem:[%s1 + $0x10] sm:$0xf]
    %v85 = vld [vmem:[%s1 + $0x14] sm:$0xf]
    %v86 = vld [vmem:[%s1 + $0x18] sm:$0xf]
    %v87 = vld [vmem:[%s1 + $0x1c] sm:$0xf]
    %v88 = vld [vmem:[%s1 + $0x20] sm:$0xf]
    %v89 = vld [vmem:[%s1 + $0x24] sm:$0xf]
    %v90 = vld [vmem:[%s1 + $0x28] sm:$0xf]
    %v91 = vld [vmem:[%s1 + $0x2c] sm:$0xf]
    %v92 = vld [vmem:[%s1 + $0x30] sm:$0xf]
    %v93 = vld [vmem:[%s1 + $0x34] sm:$0xf]
    %v94 = vld [vmem:[%s1 + $0x38] sm:$0xf]
    %v95 = vld [vmem:[%s1 + $0x3c] sm:$0xf]
    %v96 = vld [vmem:[%s1 + $0x40] sm:$0xf]
    %v97 = vld [vmem:[%s1 + $0x44] sm:$0xf]
    %v98 = vld [vmem:[%s1 + $0x48] sm:$0xf]
    %v99 = vld [vmem:[%s1 + $0x4c] sm:$0xf]
    %v100 = vld [vmem:[%s1 + $0x50] sm:$0xf]
    %v101 = vld [vmem:[%s1 + $0x54] sm:$0xf]
    %v102 = vld [vmem:[%s1 + $0x58] sm:$0xf]
    %v103 = vld [vmem:[%s1 + $0x5c] sm:$0xf]
    %v104 = vld [vmem:[%s1 + $0x60] sm:$0xf]
    %v105 = vld [vmem:[%s1 + $0x64] sm:$0xf]
    %v106 = vld [vmem:[%s1 + $0x68] sm:$0xf]
    %v107 = vld [vmem:[%s1 + $0x6c] sm:$0xf]
    %v108 = vld [vmem:[%s1 + $0x70] sm:$0xf]
    %v109 = vld [vmem:[%s1 + $0x74] sm:$0xf]
    %v110 = vld [vmem:[%s1 + $0x78] sm:$0xf]
    %v111 = vld [vmem:[%s1 + $0x7c] sm:$0xf]
    %v112 = vld [vmem:[%s1 + $0x80] sm:$0xf]
    %v113 = vld [vmem:[%s1 + $0x84] sm:$0xf]
    %v114 = vld [vmem:[%s1 + $0x88] sm:$0xf]
    %v115 = vld [vmem:[%s1 + $0x8c] sm:$0xf]
    %v116 = vld [vmem:[%s1 + $0x90] sm:$0xf]
    %v117 = vld [vmem:[%s1 + $0x94] sm:$0xf]
    %v118 = vld [vmem:[%s1 + $0x98] sm:$0xf]
    %v119 = vld [vmem:[%s1 + $0x9c] sm:$0xf]
    %v120 = vld [vmem:[%s1 + $0xa0] sm:$0xf]
    %v121 = vld [vmem:[%s1 + $0xa4] sm:$0xf]
    %v122 = vld [vmem:[%s1 + $0xa8] sm:$0xf]
    %v123 = vld [vmem:[%s1 + $0xac] sm:$0xf]
    %v124 = vld [vmem:[%s1 + $0xb0] sm:$0xf]
    %v125 = vld [vmem:[%s1 + $0xb4] sm:$0xf]
    %v126 = vld [vmem:[%s1 + $0xb8] sm:$0xf]
    %v127 = vld [vmem:[%s1 + $0xbc] sm:$0xf]
    %v128 = vld [vmem:[%s1 + $0xc0] sm:$0xf]
    %v129 = vld [vmem:[%s1 + $0xc4] sm:$0xf]
    %v130 = vld [vmem:[%s1 + $0xc8] sm:$0xf]
    %v131 = vld [vmem:[%s1 + $0xcc] sm:$0xf]
    %v132 = vld [vmem:[%s1 + $0xd0] sm:$0xf]
    %v133 = vld [vmem:[%s1 + $0xd4] sm:$0xf]
    %v134 = vld [vmem:[%s1 + $0xd8] sm:$0xf]
    %v135 = vld [vmem:[%s1 + $0xdc] sm:$0xf]
    %v136 = vld [vmem:[%s1 + $0xe0] sm:$0xf]
    %v137 = vld [vmem:[%s1 + $0xe4] sm:$0xf]
    %v138 = vld [vmem:[%s1 + $0xe8] sm:$0xf]
    %v139 = vld [vmem:[%s1 + $0xec] sm:$0xf]
    %v140 = vld [vmem:[%s1 + $0xf0] sm:$0xf]
    %v141 = vld [vmem:[%s1 + $0xf4] sm:$0xf]
    %v142 = vld [vmem:[%s1 + $0xf8] sm:$0xf]
    %v143 = vld [vmem:[%s1 + $0xfc] sm:$0xf]
    %v144 = vld [vmem:[%s2] sm:$0x1]
    %v146 = vlaneseq
    %v147 = vshrl.u32 %v146, 7
    %v148 = vsub.s32 0, %v147
    %v149 = vrot.slane %v144, %v148
    %v215 = vunpack.c.l.b16 %v16
    %v216 = vunpack.c.h.b16 %v16
    %v217 = vunpack.c.l.b16 %v17
    %v218 = vunpack.c.h.b16 %v17
    %v219 = vunpack.c.l.b16 %v18
    %v220 = vunpack.c.h.b16 %v18
    %v221 = vunpack.c.l.b16 %v19
    %v222 = vunpack.c.h.b16 %v19
    %v223 = vunpack.c.l.b16 %v20
    %v224 = vunpack.c.h.b16 %v20
    %v225 = vunpack.c.l.b16 %v21
    %v226 = vunpack.c.h.b16 %v21
    %v227 = vunpack.c.l.b16 %v22
    %v228 = vunpack.c.h.b16 %v22
    %v229 = vunpack.c.l.b16 %v23
    %v230 = vunpack.c.h.b16 %v23
    %v231 = vunpack.c.l.b16 %v24
    %v232 = vunpack.c.h.b16 %v24
    %v233 = vunpack.c.l.b16 %v25
    %v234 = vunpack.c.h.b16 %v25
    %v235 = vunpack.c.l.b16 %v26
    %v236 = vunpack.c.h.b16 %v26
    %v237 = vunpack.c.l.b16 %v27
    %v238 = vunpack.c.h.b16 %v27
    %v239 = vunpack.c.l.b16 %v28
    %v240 = vunpack.c.h.b16 %v28
    %v241 = vunpack.c.l.b16 %v29
    %v242 = vunpack.c.h.b16 %v29
    %v243 = vunpack.c.l.b16 %v30
    %v244 = vunpack.c.h.b16 %v30
    %v245 = vunpack.c.l.b16 %v31
    %v246 = vunpack.c.h.b16 %v31
    %v247 = vunpack.c.l.b16 %v32
    %v248 = vunpack.c.h.b16 %v32
    %v249 = vunpack.c.l.b16 %v33
    %v250 = vunpack.c.h.b16 %v33
    %v251 = vunpack.c.l.b16 %v34
    %v252 = vunpack.c.h.b16 %v34
    %v253 = vunpack.c.l.b16 %v35
    %v254 = vunpack.c.h.b16 %v35
    %v255 = vunpack.c.l.b16 %v36
    %v256 = vunpack.c.h.b16 %v36
    %v257 = vunpack.c.l.b16 %v37
    %v258 = vunpack.c.h.b16 %v37
    %v259 = vunpack.c.l.b16 %v38
    %v260 = vunpack.c.h.b16 %v38
    %v261 = vunpack.c.l.b16 %v39
    %v262 = vunpack.c.h.b16 %v39
    %v263 = vunpack.c.l.b16 %v40
    %v264 = vunpack.c.h.b16 %v40
    %v265 = vunpack.c.l.b16 %v41
    %v266 = vunpack.c.h.b16 %v41
    %v267 = vunpack.c.l.b16 %v42
    %v268 = vunpack.c.h.b16 %v42
    %v269 = vunpack.c.l.b16 %v43
    %v270 = vunpack.c.h.b16 %v43
    %v271 = vunpack.c.l.b16 %v44
    %v272 = vunpack.c.h.b16 %v44
    %v273 = vunpack.c.l.b16 %v45
    %v274 = vunpack.c.h.b16 %v45
    %v275 = vunpack.c.l.b16 %v46
    %v276 = vunpack.c.h.b16 %v46
    %v277 = vunpack.c.l.b16 %v47
    %v278 = vunpack.c.h.b16 %v47
    %v279 = vunpack.c.l.b16 %v48
    %v280 = vunpack.c.h.b16 %v48
    %v281 = vunpack.c.l.b16 %v49
    %v282 = vunpack.c.h.b16 %v49
    %v283 = vunpack.c.l.b16 %v50
    %v284 = vunpack.c.h.b16 %v50
    %v285 = vunpack.c.l.b16 %v51
    %v286 = vunpack.c.h.b16 %v51
    %v287 = vunpack.c.l.b16 %v52
    %v288 = vunpack.c.h.b16 %v52
    %v289 = vunpack.c.l.b16 %v53
    %v290 = vunpack.c.h.b16 %v53
    %v291 = vunpack.c.l.b16 %v54
    %v292 = vunpack.c.h.b16 %v54
    %v293 = vunpack.c.l.b16 %v55
    %v294 = vunpack.c.h.b16 %v55
    %v295 = vunpack.c.l.b16 %v56
    %v296 = vunpack.c.h.b16 %v56
    %v297 = vunpack.c.l.b16 %v57
    %v298 = vunpack.c.h.b16 %v57
    %v299 = vunpack.c.l.b16 %v58
    %v300 = vunpack.c.h.b16 %v58
    %v301 = vunpack.c.l.b16 %v59
    %v302 = vunpack.c.h.b16 %v59
    %v303 = vunpack.c.l.b16 %v60
    %v304 = vunpack.c.h.b16 %v60
    %v305 = vunpack.c.l.b16 %v61
    %v306 = vunpack.c.h.b16 %v61
    %v307 = vunpack.c.l.b16 %v62
    %v308 = vunpack.c.h.b16 %v62
    %v309 = vunpack.c.l.b16 %v63
    %v310 = vunpack.c.h.b16 %v63
    %v311 = vunpack.c.l.b16 %v64
    %v312 = vunpack.c.h.b16 %v64
    %v313 = vunpack.c.l.b16 %v65
    %v314 = vunpack.c.h.b16 %v65
    %v315 = vunpack.c.l.b16 %v66
    %v316 = vunpack.c.h.b16 %v66
    %v317 = vunpack.c.l.b16 %v67
    %v318 = vunpack.c.h.b16 %v67
    %v319 = vunpack.c.l.b16 %v68
    %v320 = vunpack.c.h.b16 %v68
    %v321 = vunpack.c.l.b16 %v69
    %v322 = vunpack.c.h.b16 %v69
    %v323 = vunpack.c.l.b16 %v70
    %v324 = vunpack.c.h.b16 %v70
    %v325 = vunpack.c.l.b16 %v71
    %v326 = vunpack.c.h.b16 %v71
    %v327 = vunpack.c.l.b16 %v72
    %v328 = vunpack.c.h.b16 %v72
    %v329 = vunpack.c.l.b16 %v73
    %v330 = vunpack.c.h.b16 %v73
    %v331 = vunpack.c.l.b16 %v74
    %v332 = vunpack.c.h.b16 %v74
    %v333 = vunpack.c.l.b16 %v75
    %v334 = vunpack.c.h.b16 %v75
    %v335 = vunpack.c.l.b16 %v76
    %v336 = vunpack.c.h.b16 %v76
    %v337 = vunpack.c.l.b16 %v77
    %v338 = vunpack.c.h.b16 %v77
    %v339 = vunpack.c.l.b16 %v78
    %v340 = vunpack.c.h.b16 %v78
    %v341 = vunpack.c.l.b16 %v79
    %v342 = vunpack.c.h.b16 %v79
    %v343 = vpack.c.b16 %v219, %v215
    %v344 = vpack.c.b16 %v220, %v216
    %v345 = vpack.c.b16 %v221, %v217
    %v346 = vpack.c.b16 %v222, %v218
    %v347 = vpack.c.b16 %v227, %v223
    %v348 = vpack.c.b16 %v228, %v224
    %v349 = vpack.c.b16 %v229, %v225
    %v350 = vpack.c.b16 %v230, %v226
    %v351 = vpack.c.b16 %v235, %v231
    %v352 = vpack.c.b16 %v236, %v232
    %v353 = vpack.c.b16 %v237, %v233
    %v354 = vpack.c.b16 %v238, %v234
    %v355 = vpack.c.b16 %v243, %v239
    %v356 = vpack.c.b16 %v244, %v240
    %v357 = vpack.c.b16 %v245, %v241
    %v358 = vpack.c.b16 %v246, %v242
    %v359 = vpack.c.b16 %v251, %v247
    %v360 = vpack.c.b16 %v252, %v248
    %v361 = vpack.c.b16 %v253, %v249
    %v362 = vpack.c.b16 %v254, %v250
    %v363 = vpack.c.b16 %v259, %v255
    %v364 = vpack.c.b16 %v260, %v256
    %v365 = vpack.c.b16 %v261, %v257
    %v366 = vpack.c.b16 %v262, %v258
    %v367 = vpack.c.b16 %v267, %v263
    %v368 = vpack.c.b16 %v268, %v264
    %v369 = vpack.c.b16 %v269, %v265
    %v370 = vpack.c.b16 %v270, %v266
    %v371 = vpack.c.b16 %v275, %v271
    %v372 = vpack.c.b16 %v276, %v272
    %v373 = vpack.c.b16 %v277, %v273
    %v374 = vpack.c.b16 %v278, %v274
    %v375 = vpack.c.b16 %v283, %v279
    %v376 = vpack.c.b16 %v284, %v280
    %v377 = vpack.c.b16 %v285, %v281
    %v378 = vpack.c.b16 %v286, %v282
    %v379 = vpack.c.b16 %v291, %v287
    %v380 = vpack.c.b16 %v292, %v288
    %v381 = vpack.c.b16 %v293, %v289
    %v382 = vpack.c.b16 %v294, %v290
    %v383 = vpack.c.b16 %v299, %v295
    %v384 = vpack.c.b16 %v300, %v296
    %v385 = vpack.c.b16 %v301, %v297
    %v386 = vpack.c.b16 %v302, %v298
    %v387 = vpack.c.b16 %v307, %v303
    %v388 = vpack.c.b16 %v308, %v304
    %v389 = vpack.c.b16 %v309, %v305
    %v390 = vpack.c.b16 %v310, %v306
    %v391 = vpack.c.b16 %v315, %v311
    %v392 = vpack.c.b16 %v316, %v312
    %v393 = vpack.c.b16 %v317, %v313
    %v394 = vpack.c.b16 %v318, %v314
    %v395 = vpack.c.b16 %v323, %v319
    %v396 = vpack.c.b16 %v324, %v320
    %v397 = vpack.c.b16 %v325, %v321
    %v398 = vpack.c.b16 %v326, %v322
    %v399 = vpack.c.b16 %v331, %v327
    %v400 = vpack.c.b16 %v332, %v328
    %v401 = vpack.c.b16 %v333, %v329
    %v402 = vpack.c.b16 %v334, %v330
    %v403 = vpack.c.b16 %v339, %v335
    %v404 = vpack.c.b16 %v340, %v336
    %v405 = vpack.c.b16 %v341, %v337
    %v406 = vpack.c.b16 %v342, %v338
    %v535 = vunpack.c.l.b16 %v80
    %v536 = vunpack.c.l.b16 %v81
    %v537 = vunpack.c.l.b16 %v82
    %v538 = vunpack.c.l.b16 %v83
    %v539 = vunpack.c.l.b16 %v84
    %v540 = vunpack.c.l.b16 %v85
    %v541 = vunpack.c.l.b16 %v86
    %v542 = vunpack.c.l.b16 %v87
    %v543 = vunpack.c.l.b16 %v88
    %v544 = vunpack.c.l.b16 %v89
    %v545 = vunpack.c.l.b16 %v90
    %v546 = vunpack.c.l.b16 %v91
    %v547 = vunpack.c.l.b16 %v92
    %v548 = vunpack.c.l.b16 %v93
    %v549 = vunpack.c.l.b16 %v94
    %v550 = vunpack.c.l.b16 %v95
    %v551 = vunpack.c.l.b16 %v96
    %v552 = vunpack.c.l.b16 %v97
    %v553 = vunpack.c.l.b16 %v98
    %v554 = vunpack.c.l.b16 %v99
    %v555 = vunpack.c.l.b16 %v100
    %v556 = vunpack.c.l.b16 %v101
    %v557 = vunpack.c.l.b16 %v102
    %v558 = vunpack.c.l.b16 %v103
    %v559 = vunpack.c.l.b16 %v104
    %v560 = vunpack.c.l.b16 %v105
    %v561 = vunpack.c.l.b16 %v106
    %v562 = vunpack.c.l.b16 %v107
    %v563 = vunpack.c.l.b16 %v108
    %v564 = vunpack.c.l.b16 %v109
    %v565 = vunpack.c.l.b16 %v110
    %v566 = vunpack.c.l.b16 %v111
    %v567 = vunpack.c.l.b16 %v112
    %v568 = vunpack.c.l.b16 %v113
    %v569 = vunpack.c.l.b16 %v114
    %v570 = vunpack.c.l.b16 %v115
    %v571 = vunpack.c.l.b16 %v116
    %v572 = vunpack.c.l.b16 %v117
    %v573 = vunpack.c.l.b16 %v118
    %v574 = vunpack.c.l.b16 %v119
    %v575 = vunpack.c.l.b16 %v120
    %v576 = vunpack.c.l.b16 %v121
    %v577 = vunpack.c.l.b16 %v122
    %v578 = vunpack.c.l.b16 %v123
    %v579 = vunpack.c.l.b16 %v124
    %v580 = vunpack.c.l.b16 %v125
    %v581 = vunpack.c.l.b16 %v126
    %v582 = vunpack.c.l.b16 %v127
    %v583 = vunpack.c.l.b16 %v128
    %v584 = vunpack.c.l.b16 %v129
    %v585 = vunpack.c.l.b16 %v130
    %v586 = vunpack.c.l.b16 %v131
    %v587 = vunpack.c.l.b16 %v132
    %v588 = vunpack.c.l.b16 %v133
    %v589 = vunpack.c.l.b16 %v134
    %v590 = vunpack.c.l.b16 %v135
    %v591 = vunpack.c.l.b16 %v136
    %v592 = vunpack.c.l.b16 %v137
    %v593 = vunpack.c.l.b16 %v138
    %v594 = vunpack.c.l.b16 %v139
    %v595 = vunpack.c.l.b16 %v140
    %v596 = vunpack.c.l.b16 %v141
    %v597 = vunpack.c.l.b16 %v142
    %v598 = vunpack.c.l.b16 %v143
    %v599 = vpack.c.b16 %v536, %v535
    %v600 = vpack.c.b16 %v538, %v537
    %v601 = vpack.c.b16 %v540, %v539
    %v602 = vpack.c.b16 %v542, %v541
    %v603 = vpack.c.b16 %v544, %v543
    %v604 = vpack.c.b16 %v546, %v545
    %v605 = vpack.c.b16 %v548, %v547
    %v606 = vpack.c.b16 %v550, %v549
    %v607 = vpack.c.b16 %v552, %v551
    %v608 = vpack.c.b16 %v554, %v553
    %v609 = vpack.c.b16 %v556, %v555
    %v610 = vpack.c.b16 %v558, %v557
    %v611 = vpack.c.b16 %v560, %v559
    %v612 = vpack.c.b16 %v562, %v561
    %v613 = vpack.c.b16 %v564, %v563
    %v614 = vpack.c.b16 %v566, %v565
    %v615 = vpack.c.b16 %v568, %v567
    %v616 = vpack.c.b16 %v570, %v569
    %v617 = vpack.c.b16 %v572, %v571
    %v618 = vpack.c.b16 %v574, %v573
    %v619 = vpack.c.b16 %v576, %v575
    %v620 = vpack.c.b16 %v578, %v577
    %v621 = vpack.c.b16 %v580, %v579
    %v622 = vpack.c.b16 %v582, %v581
    %v623 = vpack.c.b16 %v584, %v583
    %v624 = vpack.c.b16 %v586, %v585
    %v625 = vpack.c.b16 %v588, %v587
    %v626 = vpack.c.b16 %v590, %v589
    %v627 = vpack.c.b16 %v592, %v591
    %v628 = vpack.c.b16 %v594, %v593
    %v629 = vpack.c.b16 %v596, %v595
    %v630 = vpack.c.b16 %v598, %v597
    %663 = vmatprep.subr.bf16.mxu0 0
    %664 = vmatpush1.bf16.msra.mxu0 %v599
    %665 = vmatprep.subr.bf16.mxu0 0
    %666 = vmatpush1.bf16.msra.mxu0 %v600
    %667 = vmatprep.subr.bf16.mxu0 0
    %668 = vmatpush1.bf16.msra.mxu0 %v601
    %669 = vmatprep.subr.bf16.mxu0 0
    %670 = vmatpush1.bf16.msra.mxu0 %v602
    %671 = vmatprep.subr.bf16.mxu0 0
    %672 = vmatpush1.bf16.msra.mxu0 %v603
    %673 = vmatprep.subr.bf16.mxu0 0
    %674 = vmatpush1.bf16.msra.mxu0 %v604
    %675 = vmatprep.subr.bf16.mxu0 0
    %676 = vmatpush1.bf16.msra.mxu0 %v605
    %677 = vmatprep.subr.bf16.mxu0 0
    %678 = vmatpush1.bf16.msra.mxu0 %v606
    %679 = vmatprep.subr.bf16.mxu0 0
    %680 = vmatpush1.bf16.msra.mxu0 %v607
    %681 = vmatprep.subr.bf16.mxu0 0
    %682 = vmatpush1.bf16.msra.mxu0 %v608
    %683 = vmatprep.subr.bf16.mxu0 0
    %684 = vmatpush1.bf16.msra.mxu0 %v609
    %685 = vmatprep.subr.bf16.mxu0 0
    %686 = vmatpush1.bf16.msra.mxu0 %v610
    %687 = vmatprep.subr.bf16.mxu0 0
    %688 = vmatpush1.bf16.msra.mxu0 %v611
    %689 = vmatprep.subr.bf16.mxu0 0
    %690 = vmatpush1.bf16.msra.mxu0 %v612
    %691 = vmatprep.subr.bf16.mxu0 0
    %692 = vmatpush1.bf16.msra.mxu0 %v613
    %693 = vmatprep.subr.bf16.mxu0 0
    %694 = vmatpush1.bf16.msra.mxu0 %v614
    %695 = vmatprep.mubr.bf16.mxu0 %v344
    %696 = vmatmul.mubr.bf16.gmra.mrb[0].mxu0 %v343
    %v697 = vpop.f32.mrb[0].mxu0
    %v698 = vadd.f32 %v149, %v697
    %v699 = vpop.f32.mrb[0].mxu0
    %v700 = vpop.f32.mrb[0].mxu0
    %v701 = vadd.f32 %v149, %v700
    %v702 = vpop.f32.mrb[0].mxu0
    %703 = vmatprep.mubr.bf16.mxu0 %v348
    %704 = vmatmul.mubr.bf16.gmra.mrb[0].mxu0 %v347
    %v705 = vpop.f32.mrb[0].mxu0
    %v706 = vadd.f32 %v149, %v705
    %v707 = vpop.f32.mrb[0].mxu0
    %v708 = vpop.f32.mrb[0].mxu0
    %v709 = vadd.f32 %v149, %v708
    %v710 = vpop.f32.mrb[0].mxu0
    %711 = vmatprep.mubr.bf16.mxu0 %v352
    %712 = vmatmul.mubr.bf16.gmra.mrb[0].mxu0 %v351
    %v713 = vpop.f32.mrb[0].mxu0
    %v714 = vadd.f32 %v149, %v713
    %v715 = vpop.f32.mrb[0].mxu0
    %v716 = vpop.f32.mrb[0].mxu0
    %v717 = vadd.f32 %v149, %v716
    %v718 = vpop.f32.mrb[0].mxu0
    %719 = vmatprep.mubr.bf16.mxu0 %v356
    %720 = vmatmul.mubr.bf16.gmra.mrb[0].mxu0 %v355
    %v721 = vpop.f32.mrb[0].mxu0
    %v722 = vadd.f32 %v149, %v721
    %v723 = vpop.f32.mrb[0].mxu0
    %v724 = vpop.f32.mrb[0].mxu0
    %v725 = vadd.f32 %v149, %v724
    %v726 = vpop.f32.mrb[0].mxu0
    %727 = vmatprep.mubr.bf16.mxu0 %v360
    %728 = vmatmul.mubr.bf16.gmra.mrb[0].mxu0 %v359
    %v729 = vpop.f32.mrb[0].mxu0
    %v730 = vadd.f32 %v149, %v729
    %v731 = vpop.f32.mrb[0].mxu0
    %v732 = vpop.f32.mrb[0].mxu0
    %v733 = vadd.f32 %v149, %v732
    %v734 = vpop.f32.mrb[0].mxu0
    %735 = vmatprep.mubr.bf16.mxu0 %v364
    %736 = vmatmul.mubr.bf16.gmra.mrb[0].mxu0 %v363
    %v737 = vpop.f32.mrb[0].mxu0
    %v738 = vadd.f32 %v149, %v737
    %v739 = vpop.f32.mrb[0].mxu0
    %v740 = vpop.f32.mrb[0].mxu0
    %v741 = vadd.f32 %v149, %v740
    %v742 = vpop.f32.mrb[0].mxu0
    %743 = vmatprep.mubr.bf16.mxu0 %v368
    %744 = vmatmul.mubr.bf16.gmra.mrb[0].mxu0 %v367
    %v745 = vpop.f32.mrb[0].mxu0
    %v746 = vadd.f32 %v149, %v745
    %v747 = vpop.f32.mrb[0].mxu0
    %v748 = vpop.f32.mrb[0].mxu0
    %v749 = vadd.f32 %v149, %v748
    %v750 = vpop.f32.mrb[0].mxu0
    %751 = vmatprep.mubr.bf16.mxu0 %v372
    %752 = vmatmul.mubr.bf16.gmra.mrb[0].mxu0 %v371
    %v753 = vpop.f32.mrb[0].mxu0
    %v754 = vadd.f32 %v149, %v753
    %v755 = vpop.f32.mrb[0].mxu0
    %v756 = vpop.f32.mrb[0].mxu0
    %v757 = vadd.f32 %v149, %v756
    %v758 = vpop.f32.mrb[0].mxu0
    %759 = vmatprep.mubr.bf16.mxu0 %v376
    %760 = vmatmul.mubr.bf16.gmra.mrb[0].mxu0 %v375
    %v761 = vpop.f32.mrb[0].mxu0
    %v762 = vadd.f32 %v149, %v761
    %v763 = vpop.f32.mrb[0].mxu0
    %v764 = vpop.f32.mrb[0].mxu0
    %v765 = vadd.f32 %v149, %v764
    %v766 = vpop.f32.mrb[0].mxu0
    %767 = vmatprep.mubr.bf16.mxu0 %v380
    %768 = vmatmul.mubr.bf16.gmra.mrb[0].mxu0 %v379
    %v769 = vpop.f32.mrb[0].mxu0
    %v770 = vadd.f32 %v149, %v769
    %v771 = vpop.f32.mrb[0].mxu0
    %v772 = vpop.f32.mrb[0].mxu0
    %v773 = vadd.f32 %v149, %v772
    %v774 = vpop.f32.mrb[0].mxu0
    %775 = vmatprep.mubr.bf16.mxu0 %v384
    %776 = vmatmul.mubr.bf16.gmra.mrb[0].mxu0 %v383
    %v777 = vpop.f32.mrb[0].mxu0
    %v778 = vadd.f32 %v149, %v777
    %v779 = vpop.f32.mrb[0].mxu0
    %v780 = vpop.f32.mrb[0].mxu0
    %v781 = vadd.f32 %v149, %v780
    %v782 = vpop.f32.mrb[0].mxu0
    %783 = vmatprep.mubr.bf16.mxu0 %v388
    %784 = vmatmul.mubr.bf16.gmra.mrb[0].mxu0 %v387
    %v785 = vpop.f32.mrb[0].mxu0
    %v786 = vadd.f32 %v149, %v785
    %v787 = vpop.f32.mrb[0].mxu0
    %v788 = vpop.f32.mrb[0].mxu0
    %v789 = vadd.f32 %v149, %v788
    %v790 = vpop.f32.mrb[0].mxu0
    %791 = vmatprep.mubr.bf16.mxu0 %v392
    %792 = vmatmul.mubr.bf16.gmra.mrb[0].mxu0 %v391
    %v793 = vpop.f32.mrb[0].mxu0
    %v794 = vadd.f32 %v149, %v793
    %v795 = vpop.f32.mrb[0].mxu0
    %v796 = vpop.f32.mrb[0].mxu0
    %v797 = vadd.f32 %v149, %v796
    %v798 = vpop.f32.mrb[0].mxu0
    %799 = vmatprep.mubr.bf16.mxu0 %v396
    %800 = vmatmul.mubr.bf16.gmra.mrb[0].mxu0 %v395
    %v801 = vpop.f32.mrb[0].mxu0
    %v802 = vadd.f32 %v149, %v801
    %v803 = vpop.f32.mrb[0].mxu0
    %v804 = vpop.f32.mrb[0].mxu0
    %v805 = vadd.f32 %v149, %v804
    %v806 = vpop.f32.mrb[0].mxu0
    %807 = vmatprep.mubr.bf16.mxu0 %v400
    %808 = vmatmul.mubr.bf16.gmra.mrb[0].mxu0 %v399
    %v809 = vpop.f32.mrb[0].mxu0
    %v810 = vadd.f32 %v149, %v809
    %v811 = vpop.f32.mrb[0].mxu0
    %v812 = vpop.f32.mrb[0].mxu0
    %v813 = vadd.f32 %v149, %v812
    %v814 = vpop.f32.mrb[0].mxu0
    %815 = vmatprep.mubr.bf16.mxu0 %v404
    %816 = vmatmul.mubr.bf16.gmra.mrb[0].mxu0 %v403
    %v817 = vpop.f32.mrb[0].mxu0
    %v818 = vadd.f32 %v149, %v817
    %v819 = vpop.f32.mrb[0].mxu0
    %v820 = vpop.f32.mrb[0].mxu0
    %v821 = vadd.f32 %v149, %v820
    %v822 = vpop.f32.mrb[0].mxu0
    %823 = vdwg.mxu0
    %824 = vmatprep.subr.bf16.mxu0 0
    %825 = vmatpush1.bf16.msra.mxu0 %v615
    %826 = vmatprep.subr.bf16.mxu0 0
    %827 = vmatpush1.bf16.msra.mxu0 %v616
    %828 = vmatprep.subr.bf16.mxu0 0
    %829 = vmatpush1.bf16.msra.mxu0 %v617
    %830 = vmatprep.subr.bf16.mxu0 0
    %831 = vmatpush1.bf16.msra.mxu0 %v618
    %832 = vmatprep.subr.bf16.mxu0 0
    %833 = vmatpush1.bf16.msra.mxu0 %v619
    %834 = vmatprep.subr.bf16.mxu0 0
    %835 = vmatpush1.bf16.msra.mxu0 %v620
    %836 = vmatprep.subr.bf16.mxu0 0
    %837 = vmatpush1.bf16.msra.mxu0 %v621
    %838 = vmatprep.subr.bf16.mxu0 0
    %839 = vmatpush1.bf16.msra.mxu0 %v622
    %840 = vmatprep.subr.bf16.mxu0 0
    %841 = vmatpush1.bf16.msra.mxu0 %v623
    %842 = vmatprep.subr.bf16.mxu0 0
    %843 = vmatpush1.bf16.msra.mxu0 %v624
    %844 = vmatprep.subr.bf16.mxu0 0
    %845 = vmatpush1.bf16.msra.mxu0 %v625
    %846 = vmatprep.subr.bf16.mxu0 0
    %847 = vmatpush1.bf16.msra.mxu0 %v626
    %848 = vmatprep.subr.bf16.mxu0 0
    %849 = vmatpush1.bf16.msra.mxu0 %v627
    %850 = vmatprep.subr.bf16.mxu0 0
    %851 = vmatpush1.bf16.msra.mxu0 %v628
    %852 = vmatprep.subr.bf16.mxu0 0
    %853 = vmatpush1.bf16.msra.mxu0 %v629
    %854 = vmatprep.subr.bf16.mxu0 0
    %855 = vmatpush1.bf16.msra.mxu0 %v630
    %856 = vmatprep.mubr.bf16.mxu0 %v346
    %857 = vmatmul.mubr.bf16.gmra.mrb[0].mxu0 %v345
    %v858 = vpop.f32.mrb[0].mxu0
    %v859 = vadd.f32 %v698, %v858
    %v860 = vpop.f32.mrb[0].mxu0
    %v861 = vpop.f32.mrb[0].mxu0
    %v862 = vadd.f32 %v701, %v861
    %v863 = vpop.f32.mrb[0].mxu0
    %864 = vmatprep.mubr.bf16.mxu0 %v350
    %865 = vmatmul.mubr.bf16.gmra.mrb[0].mxu0 %v349
    %v866 = vpop.f32.mrb[0].mxu0
    %v867 = vadd.f32 %v706, %v866
    %v868 = vpop.f32.mrb[0].mxu0
    %v869 = vpop.f32.mrb[0].mxu0
    %v870 = vadd.f32 %v709, %v869
    %v871 = vpop.f32.mrb[0].mxu0
    %872 = vmatprep.mubr.bf16.mxu0 %v354
    %873 = vmatmul.mubr.bf16.gmra.mrb[0].mxu0 %v353
    %v874 = vpop.f32.mrb[0].mxu0
    %v875 = vadd.f32 %v714, %v874
    %v876 = vpop.f32.mrb[0].mxu0
    %v877 = vpop.f32.mrb[0].mxu0
    %v878 = vadd.f32 %v717, %v877
    %v879 = vpop.f32.mrb[0].mxu0
    %880 = vmatprep.mubr.bf16.mxu0 %v358
    %881 = vmatmul.mubr.bf16.gmra.mrb[0].mxu0 %v357
    %v882 = vpop.f32.mrb[0].mxu0
    %v883 = vadd.f32 %v722, %v882
    %v884 = vpop.f32.mrb[0].mxu0
    %v885 = vpop.f32.mrb[0].mxu0
    %v886 = vadd.f32 %v725, %v885
    %v887 = vpop.f32.mrb[0].mxu0
    %888 = vmatprep.mubr.bf16.mxu0 %v362
    %889 = vmatmul.mubr.bf16.gmra.mrb[0].mxu0 %v361
    %v890 = vpop.f32.mrb[0].mxu0
    %v891 = vadd.f32 %v730, %v890
    %v892 = vpop.f32.mrb[0].mxu0
    %v893 = vpop.f32.mrb[0].mxu0
    %v894 = vadd.f32 %v733, %v893
    %v895 = vpop.f32.mrb[0].mxu0
    %896 = vmatprep.mubr.bf16.mxu0 %v366
    %897 = vmatmul.mubr.bf16.gmra.mrb[0].mxu0 %v365
    %v898 = vpop.f32.mrb[0].mxu0
    %v899 = vadd.f32 %v738, %v898
    %v900 = vpop.f32.mrb[0].mxu0
    %v901 = vpop.f32.mrb[0].mxu0
    %v902 = vadd.f32 %v741, %v901
    %v903 = vpop.f32.mrb[0].mxu0
    %904 = vmatprep.mubr.bf16.mxu0 %v370
    %905 = vmatmul.mubr.bf16.gmra.mrb[0].mxu0 %v369
    %v906 = vpop.f32.mrb[0].mxu0
    %v907 = vadd.f32 %v746, %v906
    %v908 = vpop.f32.mrb[0].mxu0
    %v909 = vpop.f32.mrb[0].mxu0
    %v910 = vadd.f32 %v749, %v909
    %v911 = vpop.f32.mrb[0].mxu0
    %912 = vmatprep.mubr.bf16.mxu0 %v374
    %913 = vmatmul.mubr.bf16.gmra.mrb[0].mxu0 %v373
    %v914 = vpop.f32.mrb[0].mxu0
    %v915 = vadd.f32 %v754, %v914
    %v916 = vpop.f32.mrb[0].mxu0
    %v917 = vpop.f32.mrb[0].mxu0
    %v918 = vadd.f32 %v757, %v917
    %v919 = vpop.f32.mrb[0].mxu0
    %920 = vmatprep.mubr.bf16.mxu0 %v378
    %921 = vmatmul.mubr.bf16.gmra.mrb[0].mxu0 %v377
    %v922 = vpop.f32.mrb[0].mxu0
    %v923 = vadd.f32 %v762, %v922
    %v924 = vpop.f32.mrb[0].mxu0
    %v925 = vpop.f32.mrb[0].mxu0
    %v926 = vadd.f32 %v765, %v925
    %v927 = vpop.f32.mrb[0].mxu0
    %928 = vmatprep.mubr.bf16.mxu0 %v382
    %929 = vmatmul.mubr.bf16.gmra.mrb[0].mxu0 %v381
    %v930 = vpop.f32.mrb[0].mxu0
    %v931 = vadd.f32 %v770, %v930
    %v932 = vpop.f32.mrb[0].mxu0
    %v933 = vpop.f32.mrb[0].mxu0
    %v934 = vadd.f32 %v773, %v933
    %v935 = vpop.f32.mrb[0].mxu0
    %936 = vmatprep.mubr.bf16.mxu0 %v386
    %937 = vmatmul.mubr.bf16.gmra.mrb[0].mxu0 %v385
    %v938 = vpop.f32.mrb[0].mxu0
    %v939 = vadd.f32 %v778, %v938
    %v940 = vpop.f32.mrb[0].mxu0
    %v941 = vpop.f32.mrb[0].mxu0
    %v942 = vadd.f32 %v781, %v941
    %v943 = vpop.f32.mrb[0].mxu0
    %944 = vmatprep.mubr.bf16.mxu0 %v390
    %945 = vmatmul.mubr.bf16.gmra.mrb[0].mxu0 %v389
    %v946 = vpop.f32.mrb[0].mxu0
    %v947 = vadd.f32 %v786, %v946
    %v948 = vpop.f32.mrb[0].mxu0
    %v949 = vpop.f32.mrb[0].mxu0
    %v950 = vadd.f32 %v789, %v949
    %v951 = vpop.f32.mrb[0].mxu0
    %952 = vmatprep.mubr.bf16.mxu0 %v394
    %953 = vmatmul.mubr.bf16.gmra.mrb[0].mxu0 %v393
    %v954 = vpop.f32.mrb[0].mxu0
    %v955 = vadd.f32 %v794, %v954
    %v956 = vpop.f32.mrb[0].mxu0
    %v957 = vpop.f32.mrb[0].mxu0
    %v958 = vadd.f32 %v797, %v957
    %v959 = vpop.f32.mrb[0].mxu0
    %960 = vmatprep.mubr.bf16.mxu0 %v398
    %961 = vmatmul.mubr.bf16.gmra.mrb[0].mxu0 %v397
    %v962 = vpop.f32.mrb[0].mxu0
    %v963 = vadd.f32 %v802, %v962
    %v964 = vpop.f32.mrb[0].mxu0
    %v965 = vpop.f32.mrb[0].mxu0
    %v966 = vadd.f32 %v805, %v965
    %v967 = vpop.f32.mrb[0].mxu0
    %968 = vmatprep.mubr.bf16.mxu0 %v402
    %969 = vmatmul.mubr.bf16.gmra.mrb[0].mxu0 %v401
    %v970 = vpop.f32.mrb[0].mxu0
    %v971 = vadd.f32 %v810, %v970
    %v972 = vpop.f32.mrb[0].mxu0
    %v973 = vpop.f32.mrb[0].mxu0
    %v974 = vadd.f32 %v813, %v973
    %v975 = vpop.f32.mrb[0].mxu0
    %976 = vmatprep.mubr.bf16.mxu0 %v406
    %977 = vmatmul.mubr.bf16.gmra.mrb[0].mxu0 %v405
    %v978 = vpop.f32.mrb[0].mxu0
    %v979 = vadd.f32 %v818, %v978
    %v980 = vpop.f32.mrb[0].mxu0
    %v981 = vpop.f32.mrb[0].mxu0
    %v982 = vadd.f32 %v821, %v981
    %v983 = vpop.f32.mrb[0].mxu0
    %984 = vdwg.mxu0
    %v985 = vmax.f32 %v859, 0.0
    %v986 = vmax.f32 %v862, 0.0
    %v987 = vmax.f32 %v867, 0.0
    %v988 = vmax.f32 %v870, 0.0
    %v989 = vmax.f32 %v875, 0.0
    %v990 = vmax.f32 %v878, 0.0
    %v991 = vmax.f32 %v883, 0.0
    %v992 = vmax.f32 %v886, 0.0
    %v993 = vmax.f32 %v891, 0.0
    %v994 = vmax.f32 %v894, 0.0
    %v995 = vmax.f32 %v899, 0.0
    %v996 = vmax.f32 %v902, 0.0
    %v997 = vmax.f32 %v907, 0.0
    %v998 = vmax.f32 %v910, 0.0
    %v999 = vmax.f32 %v915, 0.0
    %v1000 = vmax.f32 %v918, 0.0
    %v1001 = vmax.f32 %v923, 0.0
    %v1002 = vmax.f32 %v926, 0.0
    %v1003 = vmax.f32 %v931, 0.0
    %v1004 = vmax.f32 %v934, 0.0
    %v1005 = vmax.f32 %v939, 0.0
    %v1006 = vmax.f32 %v942, 0.0
    %v1007 = vmax.f32 %v947, 0.0
    %v1008 = vmax.f32 %v950, 0.0
    %v1009 = vmax.f32 %v955, 0.0
    %v1010 = vmax.f32 %v958, 0.0
    %v1011 = vmax.f32 %v963, 0.0
    %v1012 = vmax.f32 %v966, 0.0
    %v1013 = vmax.f32 %v971, 0.0
    %v1014 = vmax.f32 %v974, 0.0
    %v1015 = vmax.f32 %v979, 0.0
    %v1016 = vmax.f32 %v982, 0.0
    %1017 = vst [vmem:[#allocation2] sm:$0xff] %v985
    %1018 = vst [vmem:[#allocation2 + $0x8] sm:$0xff] %v986
    %1019 = vst [vmem:[#allocation2 + $0x10] sm:$0xff] %v987
    %1020 = vst [vmem:[#allocation2 + $0x18] sm:$0xff] %v988
    %1021 = vst [vmem:[#allocation2 + $0x20] sm:$0xff] %v989
    %1022 = vst [vmem:[#allocation2 + $0x28] sm:$0xff] %v990
    %1023 = vst [vmem:[#allocation2 + $0x30] sm:$0xff] %v991
    %1024 = vst [vmem:[#allocation2 + $0x38] sm:$0xff] %v992
    %1025 = vst [vmem:[#allocation2 + $0x40] sm:$0xff] %v993
    %1026 = vst [vmem:[#allocation2 + $0x48] sm:$0xff] %v994
    %1027 = vst [vmem:[#allocation2 + $0x50] sm:$0xff] %v995
    %1028 = vst [vmem:[#allocation2 + $0x58] sm:$0xff] %v996
    %1029 = vst [vmem:[#allocation2 + $0x60] sm:$0xff] %v997
    %1030 = vst [vmem:[#allocation2 + $0x68] sm:$0xff] %v998
    %1031 = vst [vmem:[#allocation2 + $0x70] sm:$0xff] %v999
    %1032 = vst [vmem:[#allocation2 + $0x78] sm:$0xff] %v1000
    %1033 = vst [vmem:[#allocation2 + $0x80] sm:$0xff] %v1001
    %1034 = vst [vmem:[#allocation2 + $0x88] sm:$0xff] %v1002
    %1035 = vst [vmem:[#allocation2 + $0x90] sm:$0xff] %v1003
    %1036 = vst [vmem:[#allocation2 + $0x98] sm:$0xff] %v1004
    %1037 = vst [vmem:[#allocation2 + $0xa0] sm:$0xff] %v1005
    %1038 = vst [vmem:[#allocation2 + $0xa8] sm:$0xff] %v1006
    %1039 = vst [vmem:[#allocation2 + $0xb0] sm:$0xff] %v1007
    %1040 = vst [vmem:[#allocation2 + $0xb8] sm:$0xff] %v1008
    %1041 = vst [vmem:[#allocation2 + $0xc0] sm:$0xff] %v1009
    %1042 = vst [vmem:[#allocation2 + $0xc8] sm:$0xff] %v1010
    %1043 = vst [vmem:[#allocation2 + $0xd0] sm:$0xff] %v1011
    %1044 = vst [vmem:[#allocation2 + $0xd8] sm:$0xff] %v1012
    %1045 = vst [vmem:[#allocation2 + $0xe0] sm:$0xff] %v1013
    %1046 = vst [vmem:[#allocation2 + $0xe8] sm:$0xff] %v1014
    %1047 = vst [vmem:[#allocation2 + $0xf0] sm:$0xff] %v1015
    %1048 = vst [vmem:[#allocation2 + $0xf8] sm:$0xff] %v1016
    // Predicated region
    $region14: #{c5_forward.1} parent=1 // pred_check
      _
    $region15: #{c5_forward.1} parent=1 // pred_check_branch
      %1050 = sbr.rel (0) target = $region17
    $region16: #{c5_forward.1} parent=1 // pred_region
      %s1052 = ssub.s32 4096, 4096
      %1053 = vsyncadd [#allocation3], %s1052
      %s1054 = sshll.u32 [#allocation2], 4
      %s1055 = int_to_ptr.vmem [resolvable:$true] %s1054
      %1060 = dma.vmem_to_hbm [thread:$0]  %s1055, 4096, %s3, [#allocation3], 128, 128, 8
    $region17: #{c5_forward.1} parent=1 // pred_fallthru
      _
    // Predicated region
    $region18: #{c5_forward.1} parent=1 // pred_check
      _
    $region19: #{c5_forward.1} parent=1 // pred_check_branch
      %1062 = sbr.rel (0) target = $region21
    $region20: #{c5_forward.1} parent=1 // pred_region
      %1063 = dma.done [#allocation3], 4096
    $region21: #{c5_forward.1} parent=1 // pred_fallthru
      _
    %1064 = vsyncpa [#allocation3], 1

</llo_original>
